<compile_context>
chip_gen: v7x
topology: tpu7x:2x2x1
jax: 0.10.0
libtpu: 0.0.40
codegen_flags: <defaults>
</compile_context>

<pallas_src>
import functools

import jax
import jax.numpy as jnp
from jax import lax
from jax.experimental import pallas as pl
from jax.experimental.pallas import tpu as pltpu

EPS = 1e-5
LANES = 128
_VMEM_LIMIT_BYTES = 40 * 1024 * 1024    # > v5e 16 MiB default, < v7x physical


def _layernorm_packed_kernel(x_ref, avg_ref, scale_ref, shift_ref, o_ref):
    """Lane-dense path for D < 128: each 128-lane row packs pack = 128 // D
    logical rows.  avg_ref is a (128, 128) block-diagonal matrix whose d x d
    blocks are 1/d, so x @ avg gives every lane the mean of its own segment
    (already broadcast) on the otherwise-idle MXU instead of ~2*pack VPU
    select/reduce passes."""
    x = x_ref[...].astype(jnp.float32)                       # (T, 128)
    avg = avg_ref[...]                                       # (128, 128) f32
    mean = jnp.dot(x, avg, preferred_element_type=jnp.float32)
    c = x - mean
    var = jnp.dot(c * c, avg, preferred_element_type=jnp.float32)
    inv_std = lax.rsqrt(var + EPS)                           # population var
    y = scale_ref[...].astype(jnp.float32) * (c * inv_std) \
        + shift_ref[...].astype(jnp.float32)
    o_ref[...] = y.astype(o_ref.dtype)


def _layernorm_kernel(x_ref, scale_ref, shift_ref, o_ref, *, d):
    """One LayerNorm row per sublane row.  Lane width is a multiple of 128
    (host zero-padded when D % 128 != 0); reductions use sum/d with a
    lane-validity mask so the math stays exact and every store is unmasked.
    NOTE: the ragged last grid block computes on out-of-bounds rows whose
    contents are undefined -- harmless because rows are fully independent and
    the masked output store discards them."""
    x = x_ref[...].astype(jnp.float32)                       # (T, d_pad)
    d_pad = x.shape[-1]
    inv_d = jnp.float32(1.0 / d)
    mean = jnp.sum(x, axis=-1, keepdims=True) * inv_d        # pads are zeros
    c = x - mean
    if d_pad != d:
        valid = lax.broadcasted_iota(jnp.int32, x.shape, 1) < d
        c = jnp.where(valid, c, 0.0)
    var = jnp.sum(c * c, axis=-1, keepdims=True) * inv_d     # population var
    inv_std = lax.rsqrt(var + EPS)
    y = scale_ref[...].astype(jnp.float32) * (c * inv_std) \
        + shift_ref[...].astype(jnp.float32)
    o_ref[...] = y.astype(o_ref.dtype)


def _round_up(x, m):
    return ((x + m - 1) // m) * m


def _choose_tile_rows(n_rows, row_bytes, sublane, itemsize):
    # Dtype-aware block budget: the kernel keeps ~3 f32 temps of each block,
    # so narrow input dtypes get a smaller HBM-side block.  Measured HBM
    # roofline plateaus at ~1-4 MiB blocks, so this costs nothing on v5e/v6e
    # and buys VMEM headroom on v7x.
    target = {4: 4, 2: 2, 1: 1}.get(itemsize, 4) << 20
    t = max(sublane, (target // max(row_bytes, 1)) // sublane * sublane)
    # Keep >= ~8 grid blocks when there is enough work so v7x's two
    # TensorCores both get shards and per-core pipelining stays deep.
    min_blocks = 8
    if n_rows > min_blocks * sublane:
        cap = _round_up(pl.cdiv(n_rows, min_blocks), sublane)
        t = min(t, cap)
    if t >= n_rows:
        return n_rows            # single block covering the full row axis
    return t


@jax.jit
def layernorm(x, scale, shift):
    """LayerNorm over the last axis of x. x: (..., D); scale/shift: (D,)."""
    orig_shape = x.shape
    d = orig_shape[-1]
    rows = 1
    for s in orig_shape[:-1]:
        rows *= s
    x2 = x.reshape(rows, d)

    itemsize = jnp.dtype(x.dtype).itemsize
    sublane = {4: 8, 2: 16, 1: 32}.get(itemsize, 8)

    pack = LANES // d if d < LANES else 1
    use_packed = d < LANES and LANES % d == 0 and rows % pack == 0

    extra_inputs = []
    d_pad = d
    if use_packed:
        n_rows = rows // pack
        width = LANES                       # dense 128-lane loads/stores
        x_in = x2.reshape(n_rows, width)    # free row-major reinterpretation
        scale_in = jnp.tile(scale.reshape(1, d), (1, pack))
        shift_in = jnp.tile(shift.reshape(1, d), (1, pack))
        # Block-diagonal averaging matrix: avg[i, j] = 1/d iff lanes i, j lie
        # in the same d-wide segment.  64 KiB f32, resident (constant map).
        seg = jnp.arange(LANES, dtype=jnp.int32) // d
        avg = jnp.where(seg[:, None] == seg[None, :],
                        jnp.float32(1.0 / d), jnp.float32(0.0))
        extra_inputs = [avg]
        kernel = _layernorm_packed_kernel
    else:
        d_pad = _round_up(d, LANES)         # lane-dense stores even for odd D
        n_rows = rows
        width = d_pad
        x_in = x2 if d_pad == d else jnp.pad(x2, ((0, 0), (0, d_pad - d)))
        scale_in = jnp.pad(scale.reshape(1, d), ((0, 0), (0, d_pad - d)))
        shift_in = jnp.pad(shift.reshape(1, d), ((0, 0), (0, d_pad - d)))
        kernel = functools.partial(_layernorm_kernel, d=d)

    tile_rows = _choose_tile_rows(n_rows, width * itemsize, sublane, itemsize)
    grid = (pl.cdiv(n_rows, tile_rows),)    # ragged last block, no pad/copy

    mxu_flops = 4 * n_rows * width * width if use_packed else 0
    cost = pl.CostEstimate(
        flops=10 * rows * d + mxu_flops,
        transcendentals=rows,
        bytes_accessed=2 * rows * d * itemsize + 2 * d * itemsize,
    )

    in_specs = [pl.BlockSpec((tile_rows, width), lambda i: (i, 0))]
    if use_packed:
        in_specs.append(pl.BlockSpec((LANES, LANES), lambda i: (0, 0)))
    in_specs += [
        pl.BlockSpec((1, width), lambda i: (0, 0)),
        pl.BlockSpec((1, width), lambda i: (0, 0)),
    ]

    out = pl.pallas_call(
        kernel,
        out_shape=jax.ShapeDtypeStruct((n_rows, width), x.dtype),
        grid_spec=pltpu.PrefetchScalarGridSpec(
            num_scalar_prefetch=0,
            grid=grid,
            in_specs=in_specs,
            out_specs=pl.BlockSpec((tile_rows, width), lambda i: (i, 0)),
        ),
        compiler_params=pltpu.CompilerParams(
            dimension_semantics=("parallel",),
            vmem_limit_bytes=_VMEM_LIMIT_BYTES,
        ),
        cost_estimate=cost,
    )(x_in, *extra_inputs, scale_in, shift_in)

    if not use_packed and d_pad != d:
        out = out[:, :d]                    # strip host-side feature padding
    return out.reshape(orig_shape)


if __name__ == "__main__":
    key = jax.random.PRNGKey(0)

    def _reference(x, scale, shift):
        # Same math as the PyTorch forward (unbiased=False variance).
        mean = jnp.mean(x, axis=-1, keepdims=True)
        var = jnp.mean((x - mean) ** 2, axis=-1, keepdims=True)
        return scale * ((x - mean) / jnp.sqrt(var + EPS)) + shift

    # Primary case implied by the module: batch=2, seq=8, emb_dim=32 (packed
    # MXU segmented-mean path).  Inputs are rounded to bf16-representable f32
    # so the check stays tight regardless of how the MXU decomposes f32 passes.
    B, S, D = 2, 8, 32
    k0, k1 = jax.random.split(key)
    x = jax.random.normal(k0, (B, S, D), dtype=jnp.float32)
    x = x.astype(jnp.bfloat16).astype(jnp.float32)
    scale = jnp.ones((D,), dtype=jnp.float32)   # nn.Parameter(torch.ones(D))
    shift = jnp.zeros((D,), dtype=jnp.float32)  # nn.Parameter(torch.zeros(D))
    y = layernorm(x, scale, shift)
    jax.block_until_ready(y)
    assert jnp.allclose(y, _reference(x, scale, shift), atol=1e-5, rtol=1e-5), \
        "packed-path mismatch vs reference"

    # Ragged-width case (D >= 128, D % 128 != 0): exercises the host zero-pad
    # + lane-valid-mask kernel (unmasked lane-dense stores).
    B2, S2, D2 = 2, 8, 192
    x2 = jax.random.normal(k1, (B2, S2, D2), dtype=jnp.float32)
    scale2 = jnp.linspace(0.5, 1.5, D2, dtype=jnp.float32)
    shift2 = jnp.linspace(-0.1, 0.1, D2, dtype=jnp.float32)
    y2 = layernorm(x2, scale2, shift2)
    jax.block_until_ready(y2)
    assert jnp.allclose(y2, _reference(x2, scale2, shift2), atol=1e-5, rtol=1e-5), \
        "padded-path mismatch vs reference"

    print("KERNEL_OK")
</pallas_src>

<mosaic_0001>
module attributes {stable_mosaic.version = 11 : i64} {
  func.func @_layernorm_packed_kernel(%arg0: i32, %arg1: memref<4x128xf32, #tpu.memory_space<vmem>>, %arg2: memref<128x128xf32, #tpu.memory_space<vmem>>, %arg3: memref<1x128xf32, #tpu.memory_space<vmem>>, %arg4: memref<1x128xf32, #tpu.memory_space<vmem>>, %arg5: memref<4x128xf32, #tpu.memory_space<vmem>>) attributes {dimension_semantics = [#tpu.dimension_semantics<parallel>], iteration_bounds = array<i64: 1>, scalar_prefetch = 0 : i64, scratch_operands = 0 : i64, tpu.core_type = #tpu.core_type<tc>, window_params = [{transform_indices = @transform_0, window_bounds = array<i64: 4, 128>}, {pipeline_mode = #tpu.pipeline_mode<synchronous>, transform_indices = @transform_1, window_bounds = array<i64: 128, 128>}, {pipeline_mode = #tpu.pipeline_mode<synchronous>, transform_indices = @transform_2, window_bounds = array<i64: 1, 128>}, {pipeline_mode = #tpu.pipeline_mode<synchronous>, transform_indices = @transform_3, window_bounds = array<i64: 1, 128>}, {transform_indices = @transform_4, window_bounds = array<i64: 4, 128>}]} {
    %c0 = arith.constant 0 : index
    %c0_0 = arith.constant 0 : index
    %0 = vector.load %arg1[%c0, %c0_0] : memref<4x128xf32, #tpu.memory_space<vmem>>, vector<4x128xf32>
    %c0_1 = arith.constant 0 : index
    %c0_2 = arith.constant 0 : index
    %1 = vector.load %arg2[%c0_1, %c0_2] : memref<128x128xf32, #tpu.memory_space<vmem>>, vector<128x128xf32>
    %cst = arith.constant dense<0.000000e+00> : vector<4x128xf32>
    %2 = tpu.matmul %0, %1, %cst {dimension_numbers = #tpu.dot_dimension_numbers<[1], [0], [0], [1], [0, 0, 1, 1], [], []>} : vector<4x128xf32>, vector<128x128xf32>, vector<4x128xf32> -> vector<4x128xf32>
    %3 = arith.subf %0, %2 : vector<4x128xf32>
    %4 = arith.mulf %3, %3 : vector<4x128xf32>
    %cst_3 = arith.constant dense<0.000000e+00> : vector<4x128xf32>
    %5 = tpu.matmul %4, %1, %cst_3 {dimension_numbers = #tpu.dot_dimension_numbers<[1], [0], [0], [1], [0, 0, 1, 1], [], []>} : vector<4x128xf32>, vector<128x128xf32>, vector<4x128xf32> -> vector<4x128xf32>
    %cst_4 = arith.constant 9.99999974E-6 : f32
    %6 = vector.broadcast %cst_4 : f32 to vector<4x128xf32>
    %7 = arith.addf %5, %6 : vector<4x128xf32>
    %8 = math.rsqrt %7 : vector<4x128xf32>
    %c0_5 = arith.constant 0 : index
    %c0_6 = arith.constant 0 : index
    %9 = vector.load %arg3[%c0_5, %c0_6] : memref<1x128xf32, #tpu.memory_space<vmem>>, vector<1x128xf32>
    %10 = arith.mulf %3, %8 : vector<4x128xf32>
    %11 = vector.broadcast %9 : vector<1x128xf32> to vector<4x128xf32>
    %12 = arith.mulf %11, %10 : vector<4x128xf32>
    %c0_7 = arith.constant 0 : index
    %c0_8 = arith.constant 0 : index
    %13 = vector.load %arg4[%c0_7, %c0_8] : memref<1x128xf32, #tpu.memory_space<vmem>>, vector<1x128xf32>
    %14 = vector.broadcast %13 : vector<1x128xf32> to vector<4x128xf32>
    %15 = arith.addf %12, %14 : vector<4x128xf32>
    %c0_9 = arith.constant 0 : index
    %c0_10 = arith.constant 0 : index
    %16 = vector.load %arg5[%c0_9, %c0_10] : memref<4x128xf32, #tpu.memory_space<vmem>>, vector<4x128xf32>
    tpu.vector_store %arg5[%c0_9, %c0_10], %15 {strides = array<i32>} : memref<4x128xf32, #tpu.memory_space<vmem>>, vector<4x128xf32>,
    return
  }
  func.func @transform_0(%arg0: i32) -> (i32, i32) {
    %c0_i32 = arith.constant 0 : i32
    %c0_i32_0 = arith.constant 0 : i32
    return %arg0, %c0_i32 : i32, i32
  }
  func.func @transform_1(%arg0: i32) -> (i32, i32) {
    %c0_i32 = arith.constant 0 : i32
    %c0_i32_0 = arith.constant 0 : i32
    %c0_i32_1 = arith.constant 0 : i32
    return %c0_i32, %c0_i32_0 : i32, i32
  }
  func.func @transform_2(%arg0: i32) -> (i32, i32) {
    %c0_i32 = arith.constant 0 : i32
    %c0_i32_0 = arith.constant 0 : i32
    %c0_i32_1 = arith.constant 0 : i32
    return %c0_i32, %c0_i32_0 : i32, i32
  }
  func.func @transform_3(%arg0: i32) -> (i32, i32) {
    %c0_i32 = arith.constant 0 : i32
    %c0_i32_0 = arith.constant 0 : i32
    %c0_i32_1 = arith.constant 0 : i32
    return %c0_i32, %c0_i32_0 : i32, i32
  }
  func.func @transform_4(%arg0: i32) -> (i32, i32) {
    %c0_i32 = arith.constant 0 : i32
    %c0_i32_0 = arith.constant 0 : i32
    return %arg0, %c0_i32 : i32, i32
  }
}

</mosaic_0001>

<llo_original>
// kernel: layernorm.1
$region0: #{layernorm.1}
  #allocation0 [shape = 'u32[]', space=smem, size = 0x4, offset = 0x4, fixed_abs, tag = 'smem constant byte address 0x4 - core index']
  #allocation1 [shape = 'u32[144,128]{1,0:T(1,128)}', space=vmem, size = 0x12000, scoped, tag = 'internal scratch']
  %s0 = inlined_call_operand.vmem [shape: f32[4,128], index: 0, kind: input, shape index: {}]
  %s1 = inlined_call_operand.vmem [shape: f32[128,128], index: 1, kind: input, shape index: {}]
  %s2 = inlined_call_operand.vmem [shape: f32[1,128], index: 2, kind: input, shape index: {}]
  %s3 = inlined_call_operand.vmem [shape: f32[1,128], index: 3, kind: input, shape index: {}]
  %s4 = inlined_call_operand.vmem [shape: f32[4,128], index: 4, kind: output, shape index: {}]
  %s5 = sld [smem:[#allocation0]]
  $region26: #{layernorm.1} parent=0
    _
  %s7 = ssub.s32 1, %s5
  %s8 = scalar_select 0, %s7, %s5
  // Predicated region
  $region2: #{layernorm.1} parent=0 // pred_check
    _
  $region3: #{layernorm.1} parent=0 // pred_check_branch
    %10 = sbr.rel (0) target = $region5
  $region4: #{layernorm.1} parent=0 // pred_region
    _
  $region5: #{layernorm.1} parent=0 // pred_fallthru
    _
  // Predicated region
  $region6: #{layernorm.1} parent=0 // pred_check
    _
  $region7: #{layernorm.1} parent=0 // pred_check_branch
    %12 = sbr.rel (0) target = $region9
  $region8: #{layernorm.1} parent=0 // pred_region
    _
  $region9: #{layernorm.1} parent=0 // pred_fallthru
    _
  // Predicated region
  $region10: #{layernorm.1} parent=0 // pred_check
    _
  $region11: #{layernorm.1} parent=0 // pred_check_branch
    %14 = sbr.rel (0) target = $region13
  $region12: #{layernorm.1} parent=0 // pred_region
    _
  $region13: #{layernorm.1} parent=0 // pred_fallthru
    _
  // Predicated region
  $region14: #{layernorm.1} parent=0 // pred_check
    _
  $region15: #{layernorm.1} parent=0 // pred_check_branch
    %16 = sbr.rel (0) target = $region17
  $region16: #{layernorm.1} parent=0 // pred_region
    _
  $region17: #{layernorm.1} parent=0 // pred_fallthru
    _
  %v17 = vld [vmem:[%s0] sm:$0xf]
  %v18 = vld [vmem:[%s1] sm:$0xff]
  %v19 = vld [vmem:[%s1 + $0x8] sm:$0xff]
  %v20 = vld [vmem:[%s1 + $0x10] sm:$0xff]
  %v21 = vld [vmem:[%s1 + $0x18] sm:$0xff]
  %v22 = vld [vmem:[%s1 + $0x20] sm:$0xff]
  %v23 = vld [vmem:[%s1 + $0x28] sm:$0xff]
  %v24 = vld [vmem:[%s1 + $0x30] sm:$0xff]
  %v25 = vld [vmem:[%s1 + $0x38] sm:$0xff]
  %v26 = vld [vmem:[%s1 + $0x40] sm:$0xff]
  %v27 = vld [vmem:[%s1 + $0x48] sm:$0xff]
  %v28 = vld [vmem:[%s1 + $0x50] sm:$0xff]
  %v29 = vld [vmem:[%s1 + $0x58] sm:$0xff]
  %v30 = vld [vmem:[%s1 + $0x60] sm:$0xff]
  %v31 = vld [vmem:[%s1 + $0x68] sm:$0xff]
  %v32 = vld [vmem:[%s1 + $0x70] sm:$0xff]
  %v33 = vld [vmem:[%s1 + $0x78] sm:$0xff]
  %34 = vmatprep.subr.mxu0 0.0
  %35 = vmatpush1.msra.mxu0 %v18
  %36 = vmatprep.subr.mxu0 0.0
  %37 = vmatpush1.msra.mxu0 %v19
  %38 = vmatprep.subr.mxu0 0.0
  %39 = vmatpush1.msra.mxu0 %v20
  %40 = vmatprep.subr.mxu0 0.0
  %41 = vmatpush1.msra.mxu0 %v21
  %42 = vmatprep.subr.mxu0 0.0
  %43 = vmatpush1.msra.mxu0 %v22
  %44 = vmatprep.subr.mxu0 0.0
  %45 = vmatpush1.msra.mxu0 %v23
  %46 = vmatprep.subr.mxu0 0.0
  %47 = vmatpush1.msra.mxu0 %v24
  %48 = vmatprep.subr.mxu0 0.0
  %49 = vmatpush1.msra.mxu0 %v25
  %50 = vmatprep.subr.mxu0 0.0
  %51 = vmatpush1.msra.mxu0 %v26
  %52 = vmatprep.subr.mxu0 0.0
  %53 = vmatpush1.msra.mxu0 %v27
  %54 = vmatprep.subr.mxu0 0.0
  %55 = vmatpush1.msra.mxu0 %v28
  %56 = vmatprep.subr.mxu0 0.0
  %57 = vmatpush1.msra.mxu0 %v29
  %58 = vmatprep.subr.mxu0 0.0
  %59 = vmatpush1.msra.mxu0 %v30
  %60 = vmatprep.subr.mxu0 0.0
  %61 = vmatpush1.msra.mxu0 %v31
  %62 = vmatprep.subr.mxu0 0.0
  %63 = vmatpush1.msra.mxu0 %v32
  %64 = vmatprep.subr.mxu0 0.0
  %65 = vmatpush1.msra.mxu0 %v33
  %66 = vmatprep.subr.mxu0 0.0
  %67 = vmatpush1.msra.mxu0 0.0
  %68 = vmatprep.subr.mxu0 0.0
  %69 = vmatpush1.msra.mxu0 0.0
  %70 = vmatprep.subr.mxu0 0.0
  %71 = vmatpush1.msra.mxu0 0.0
  %72 = vmatprep.subr.mxu0 0.0
  %73 = vmatpush1.msra.mxu0 0.0
  %74 = vmatprep.subr.mxu0 0.0
  %75 = vmatpush1.msra.mxu0 0.0
  %76 = vmatprep.subr.mxu0 0.0
  %77 = vmatpush1.msra.mxu0 0.0
  %78 = vmatprep.subr.mxu0 0.0
  %79 = vmatpush1.msra.mxu0 0.0
  %80 = vmatprep.subr.mxu0 0.0
  %81 = vmatpush1.msra.mxu0 0.0
  %82 = vmatprep.subr.mxu0 0.0
  %83 = vmatpush1.msra.mxu0 0.0
  %84 = vmatprep.subr.mxu0 0.0
  %85 = vmatpush1.msra.mxu0 0.0
  %86 = vmatprep.subr.mxu0 0.0
  %87 = vmatpush1.msra.mxu0 0.0
  %88 = vmatprep.subr.mxu0 0.0
  %89 = vmatpush1.msra.mxu0 0.0
  %90 = vmatprep.subr.mxu0 0.0
  %91 = vmatpush1.msra.mxu0 0.0
  %92 = vmatprep.subr.mxu0 0.0
  %93 = vmatpush1.msra.mxu0 0.0
  %94 = vmatprep.subr.mxu0 0.0
  %95 = vmatpush1.msra.mxu0 0.0
  %96 = vmatprep.subr.mxu0 0.0
  %97 = vmatpush1.msra.mxu0 0.0
  %98 = vmatprep.mubr.f32.mxu0 0.0
  %99 = vmatmul.mubr.f32.gmra.mrb[0].mxu0 %v17
  %v100 = vpop.f32.mrb[0].mxu0
  %v101 = vadd.f32 0.0, %v100
  %v102 = vpop.f32.mrb[0].mxu0
  %103 = vdwg.mxu0
  %v104 = vsub.f32 %v17, %v101
  %v105 = vmul.f32 %v104, %v104
  %106 = vmatprep.subr.mxu0 0.0
  %107 = vmatpush1.msra.mxu0 %v18
  %108 = vmatprep.subr.mxu0 0.0
  %109 = vmatpush1.msra.mxu0 %v19
  %110 = vmatprep.subr.mxu0 0.0
  %111 = vmatpush1.msra.mxu0 %v20
  %112 = vmatprep.subr.mxu0 0.0
  %113 = vmatpush1.msra.mxu0 %v21
  %114 = vmatprep.subr.mxu0 0.0
  %115 = vmatpush1.msra.mxu0 %v22
  %116 = vmatprep.subr.mxu0 0.0
  %117 = vmatpush1.msra.mxu0 %v23
  %118 = vmatprep.subr.mxu0 0.0
  %119 = vmatpush1.msra.mxu0 %v24
  %120 = vmatprep.subr.mxu0 0.0
  %121 = vmatpush1.msra.mxu0 %v25
  %122 = vmatprep.subr.mxu0 0.0
  %123 = vmatpush1.msra.mxu0 %v26
  %124 = vmatprep.subr.mxu0 0.0
  %125 = vmatpush1.msra.mxu0 %v27
  %126 = vmatprep.subr.mxu0 0.0
  %127 = vmatpush1.msra.mxu0 %v28
  %128 = vmatprep.subr.mxu0 0.0
  %129 = vmatpush1.msra.mxu0 %v29
  %130 = vmatprep.subr.mxu0 0.0
  %131 = vmatpush1.msra.mxu0 %v30
  %132 = vmatprep.subr.mxu0 0.0
  %133 = vmatpush1.msra.mxu0 %v31
  %134 = vmatprep.subr.mxu0 0.0
  %135 = vmatpush1.msra.mxu0 %v32
  %136 = vmatprep.subr.mxu0 0.0
  %137 = vmatpush1.msra.mxu0 %v33
  %138 = vmatprep.subr.mxu0 0.0
  %139 = vmatpush1.msra.mxu0 0.0
  %140 = vmatprep.subr.mxu0 0.0
  %141 = vmatpush1.msra.mxu0 0.0
  %142 = vmatprep.subr.mxu0 0.0
  %143 = vmatpush1.msra.mxu0 0.0
  %144 = vmatprep.subr.mxu0 0.0
  %145 = vmatpush1.msra.mxu0 0.0
  %146 = vmatprep.subr.mxu0 0.0
  %147 = vmatpush1.msra.mxu0 0.0
  %148 = vmatprep.subr.mxu0 0.0
  %149 = vmatpush1.msra.mxu0 0.0
  %150 = vmatprep.subr.mxu0 0.0
  %151 = vmatpush1.msra.mxu0 0.0
  %152 = vmatprep.subr.mxu0 0.0
  %153 = vmatpush1.msra.mxu0 0.0
  %154 = vmatprep.subr.mxu0 0.0
  %155 = vmatpush1.msra.mxu0 0.0
  %156 = vmatprep.subr.mxu0 0.0
  %157 = vmatpush1.msra.mxu0 0.0
  %158 = vmatprep.subr.mxu0 0.0
  %159 = vmatpush1.msra.mxu0 0.0
  %160 = vmatprep.subr.mxu0 0.0
  %161 = vmatpush1.msra.mxu0 0.0
  %162 = vmatprep.subr.mxu0 0.0
  %163 = vmatpush1.msra.mxu0 0.0
  %164 = vmatprep.subr.mxu0 0.0
  %165 = vmatpush1.msra.mxu0 0.0
  %166 = vmatprep.subr.mxu0 0.0
  %167 = vmatpush1.msra.mxu0 0.0
  %168 = vmatprep.subr.mxu0 0.0
  %169 = vmatpush1.msra.mxu0 0.0
  %170 = vmatprep.mubr.f32.mxu0 0.0
  %171 = vmatmul.mubr.f32.gmra.mrb[0].mxu0 %v105
  %v172 = vpop.f32.mrb[0].mxu0
  %v173 = vadd.f32 1e-05, %v172
  %v174 = vpop.f32.mrb[0].mxu0
  %175 = vdwg.mxu0
  %v176 = vrsqrt.pop %v173
  %v177 = vld [vmem:[%s2] sm:$0x1]
  %v178 = vmul.f32 %v104, %v176
  %v180 = vlaneseq
  %v181 = vshrl.u32 %v180, 7
  %v182 = vsub.s32 0, %v181
  %v183 = vrot.slane %v177, %v182
  %v185 = vmul.f32 %v183, %v178
  %v186 = vld [vmem:[%s3] sm:$0x1]
  %v188 = vlaneseq
  %v189 = vshrl.u32 %v188, 7
  %v190 = vsub.s32 0, %v189
  %v191 = vrot.slane %v186, %v190
  %v193 = vadd.f32 %v185, %v191
  %194 = vst [vmem:[%s4] sm:$0xf] %v193
  // Predicated region
  $region18: #{layernorm.1} parent=0 // pred_check
    _
  $region19: #{layernorm.1} parent=0 // pred_check_branch
    %196 = sbr.rel (0) target = $region21
  $region20: #{layernorm.1} parent=0 // pred_region
    _
  $region21: #{layernorm.1} parent=0 // pred_fallthru
    _
  // Predicated region
  $region22: #{layernorm.1} parent=0 // pred_check
    _
  $region23: #{layernorm.1} parent=0 // pred_check_branch
    %198 = sbr.rel (0) target = $region25
  $region24: #{layernorm.1} parent=0 // pred_region
    _
  $region25: #{layernorm.1} parent=0 // pred_fallthru
    _

</llo_original>
